<compile_context>
chip_gen: v7x
topology: tpu7x:2x2x1
jax: 0.10.0
libtpu: 0.0.40
codegen_flags: <defaults>
</compile_context>

<pallas_src>
import jax
import jax.numpy as jnp
from jax.experimental import pallas as pl
from jax.experimental.pallas import tpu as pltpu


def _attn_kernel(eo_ref, wv_ref, out_ref):
    # eo_ref : (T, Bb, H)  time-major chunk of encoder outputs (native layout)
    # wv_ref : (1, H)      fused scoring vector  (W^T v)[:H], f32
    # out_ref: (Bb, T)     softmax attention weights, T on the lane axis
    x = eo_ref[...].astype(jnp.float32)                # cast in-register (free vs HBM)
    wv = wv_ref[...]                                   # (1, H) broadcasts over (T, Bb, H)
    s = jnp.sum(x * wv, axis=-1)                       # (T, Bb)  lane reduce over H
    s = jnp.transpose(s)                               # (Bb, T)  small in-vreg swap (XLU)
    # numerically-stable softmax over T (lane axis)
    m = jnp.max(s, axis=-1, keepdims=True)             # (Bb, 1)
    e = jnp.exp(s - m)
    denom = jnp.sum(e, axis=-1, keepdims=True)         # (Bb, 1)
    out_ref[...] = e * pl.reciprocal(denom, approx=False)


def _round_up(x, m):
    return (x + m - 1) // m * m


def _vmem_budget_bytes():
    """Total (double-buffered) VMEM budget for this kernel's blocks."""
    try:
        cap = pltpu.get_tpu_info().vmem_capacity_bytes
    except Exception:
        cap = 64 << 20          # conservative fallback (v7x physical VMEM per TC)
    # use ~3/8 of physical VMEM, capped at 48 MiB (v5e/v6e have 128 MiB)
    return min(cap * 3 // 8, 48 << 20)


def _min_grid_steps():
    """Chips with two TensorCores want >=2 'parallel' grid steps; single-TC
    chips (v5e/v6e: the grid is a serial loop) prefer the fewest, largest
    blocks."""
    try:
        kind = jax.devices()[0].device_kind.lower()
    except Exception:
        return 1
    return 2 if "v7" in kind else 1


def _pick_block_b(B, T, H, itemsize, budget_bytes, min_steps):
    """Batch rows per grid step, sized with (8,128)-padded VMEM tiles.

    The output block is (Bb, T), so Bb must be a multiple of 8 or equal B.
    Grow Bb while it divides B, keeps >= min_steps grid steps, and the
    double-buffered (padded) eo + out blocks stay within the budget.
    """
    def block_bytes(bb):
        eo = T * _round_up(bb, 8) * _round_up(H, 128) * itemsize     # (T, bb, H)
        out = _round_up(bb, 8) * _round_up(T, 128) * 4               # (bb, T) f32
        return 2 * (eo + out)                                        # double-buffered

    if B % 8 != 0:
        # Whole batch in one block.  For extremely long sequences a T-chunked
        # online-softmax path would be needed here; not required at these sizes.
        return B
    bb = 8
    while (B % (bb * 2) == 0
           and B // (bb * 2) >= min_steps
           and block_bytes(bb * 2) <= budget_bytes):
        bb *= 2
    return bb


def attn_forward(encoder_outputs, g, weight, bias, v):
    """encoder_outputs: (T, B, H) (any float dtype), g: (B, G) or None.

    weight: (H, H+G), bias: (H,), v: (H,)
    Returns attention weights of shape (B, 1, T), matching the PyTorch module.
    """
    eo = jnp.asarray(encoder_outputs)                     # native dtype & (T,B,H) layout
    T, B, H = eo.shape

    # Fold Linear + v scoring into one vector.  The g contribution and bias are
    # constant over T per batch element and cancel exactly in the softmax, so
    # g and bias never enter the kernel (and no (B,T,H+G) concat exists).
    weight = jnp.asarray(weight, jnp.float32)             # (H, H+G)
    v = jnp.asarray(v, jnp.float32)                       # (H,)
    wv = (weight[:, :H].T @ v).reshape(1, H)              # (1, H) f32

    itemsize = jnp.dtype(eo.dtype).itemsize
    budget = _vmem_budget_bytes()
    Bb = _pick_block_b(B, T, H, itemsize, budget, _min_grid_steps())
    grid = (B // Bb,)

    cost = pl.CostEstimate(
        flops=2 * B * T * H + 4 * B * T,
        transcendentals=B * T,
        bytes_accessed=B * T * H * itemsize + H * 4 + B * T * 4,
    )

    out = pl.pallas_call(
        _attn_kernel,
        out_shape=jax.ShapeDtypeStruct((B, T), jnp.float32),
        grid_spec=pltpu.PrefetchScalarGridSpec(
            num_scalar_prefetch=0,
            grid=grid,
            in_specs=[
                pl.BlockSpec((T, Bb, H), lambda b: (0, b, 0)),   # native (T,B,H), no transpose
                pl.BlockSpec((1, H), lambda b: (0, 0)),
            ],
            out_specs=pl.BlockSpec((Bb, T), lambda b: (b, 0)),
        ),
        compiler_params=pltpu.CompilerParams(
            dimension_semantics=("parallel",),
            vmem_limit_bytes=budget + (16 << 20),
        ),
        cost_estimate=cost,
    )(eo, wv)                                             # (B, T)

    return out[:, None, :]                                # (B, 1, T)


def _reference(encoder_outputs, g, weight, bias, v):
    # Pure-JAX reference mirroring the full PyTorch module (with g and bias).
    eo = jnp.transpose(jnp.asarray(encoder_outputs, jnp.float32), (1, 0, 2))  # (B, T, H)
    B, T, H = eo.shape
    if g is not None and g.shape[-1] > 0:
        g_rep = jnp.broadcast_to(g[:, None, :], (B, T, g.shape[-1]))
        inp = jnp.concatenate([eo, g_rep], axis=2)
    else:
        inp = eo
    energy = jnp.einsum("bti,hi->bth", inp, weight) + bias  # (B, T, H)
    scores = jnp.einsum("bth,h->bt", energy, v)             # (B, T)
    return jax.nn.softmax(scores, axis=1)[:, None, :]       # (B, 1, T)


if __name__ == "__main__":
    # Small shapes consistent with the module: T=8, B=2, hidden=32, g_size=16.
    T, B, H, G = 8, 2, 32, 16
    Hin = H + G

    key = jax.random.PRNGKey(0)
    k_eo, k_g, k_w, k_b, k_v = jax.random.split(key, 5)

    encoder_outputs = jax.random.normal(k_eo, (T, B, H), dtype=jnp.float32)
    g = jax.random.normal(k_g, (B, G), dtype=jnp.float32)

    # Deterministic parameter init mirroring nn.Linear + the custom v init.
    k_lin = 1.0 / jnp.sqrt(jnp.float32(Hin))
    weight = jax.random.uniform(k_w, (H, Hin), jnp.float32, -k_lin, k_lin)
    bias = jax.random.uniform(k_b, (H,), jnp.float32, -k_lin, k_lin)
    stdv = 1.0 / jnp.sqrt(jnp.float32(H))
    v = stdv * jax.random.normal(k_v, (H,), dtype=jnp.float32)

    out = attn_forward(encoder_outputs, g, weight, bias, v)
    out = jax.block_until_ready(out)

    ref = _reference(encoder_outputs, g, weight, bias, v)
    assert out.shape == (B, 1, T), out.shape
    assert jnp.allclose(out, ref, atol=1e-5, rtol=1e-5), "mismatch vs reference"

    print("KERNEL_OK")
</pallas_src>

<mosaic_0001>
module attributes {stable_mosaic.version = 11 : i64} {
  func.func @_attn_kernel(%arg0: i32, %arg1: memref<8x2x32xf32, #tpu.memory_space<vmem>>, %arg2: memref<1x32xf32, #tpu.memory_space<vmem>>, %arg3: memref<2x8xf32, #tpu.memory_space<vmem>>) attributes {dimension_semantics = [#tpu.dimension_semantics<parallel>], iteration_bounds = array<i64: 1>, scalar_prefetch = 0 : i64, scratch_operands = 0 : i64, tpu.core_type = #tpu.core_type<tc>, window_params = [{transform_indices = @transform_0, window_bounds = array<i64: 8, 2, 32>}, {pipeline_mode = #tpu.pipeline_mode<synchronous>, transform_indices = @transform_1, window_bounds = array<i64: 1, 32>}, {transform_indices = @transform_2, window_bounds = array<i64: 2, 8>}]} {
    %c0 = arith.constant 0 : index
    %c0_0 = arith.constant 0 : index
    %c0_1 = arith.constant 0 : index
    %0 = vector.load %arg1[%c0, %c0_0, %c0_1] : memref<8x2x32xf32, #tpu.memory_space<vmem>>, vector<8x2x32xf32>
    %c0_2 = arith.constant 0 : index
    %c0_3 = arith.constant 0 : index
    %1 = vector.load %arg2[%c0_2, %c0_3] : memref<1x32xf32, #tpu.memory_space<vmem>>, vector<1x32xf32>
    %2 = vector.shape_cast %1 : vector<1x32xf32> to vector<1x1x32xf32>
    %3 = vector.broadcast %2 : vector<1x1x32xf32> to vector<8x2x32xf32>
    %4 = arith.mulf %0, %3 : vector<8x2x32xf32>
    %cst = arith.constant dense<0.000000e+00> : vector<8x2xf32>
    %5 = vector.multi_reduction <add>, %4, %cst [2] : vector<8x2x32xf32> to vector<8x2xf32>
    %6 = tpu.transpose %5, [1, 0] : vector<8x2xf32> -> vector<2x8xf32>
    %cst_4 = arith.constant dense<0xFF800000> : vector<2xf32>
    %7 = vector.multi_reduction <maximumf>, %6, %cst_4 [1] : vector<2x8xf32> to vector<2xf32>
    %8 = vector.shape_cast %7 : vector<2xf32> to vector<2x1xf32>
    %9 = vector.broadcast %8 : vector<2x1xf32> to vector<2x8xf32>
    %10 = arith.subf %6, %9 : vector<2x8xf32>
    %11 = math.exp %10 : vector<2x8xf32>
    %cst_5 = arith.constant dense<0.000000e+00> : vector<2xf32>
    %12 = vector.multi_reduction <add>, %11, %cst_5 [1] : vector<2x8xf32> to vector<2xf32>
    %13 = vector.shape_cast %12 : vector<2xf32> to vector<2x1xf32>
    %14 = tpu.reciprocal %13 : vector<2x1xf32> -> vector<2x1xf32>
    %15 = vector.broadcast %14 : vector<2x1xf32> to vector<2x8xf32>
    %16 = arith.mulf %11, %15 : vector<2x8xf32>
    %c0_6 = arith.constant 0 : index
    %c0_7 = arith.constant 0 : index
    %17 = vector.load %arg3[%c0_6, %c0_7] : memref<2x8xf32, #tpu.memory_space<vmem>>, vector<2x8xf32>
    tpu.vector_store %arg3[%c0_6, %c0_7], %16 {strides = array<i32>} : memref<2x8xf32, #tpu.memory_space<vmem>>, vector<2x8xf32>,
    return
  }
  func.func @transform_0(%arg0: i32) -> (i32, i32, i32) {
    %c0_i32 = arith.constant 0 : i32
    %c0_i32_0 = arith.constant 0 : i32
    %c0_i32_1 = arith.constant 0 : i32
    return %c0_i32, %arg0, %c0_i32_0 : i32, i32, i32
  }
  func.func @transform_1(%arg0: i32) -> (i32, i32) {
    %c0_i32 = arith.constant 0 : i32
    %c0_i32_0 = arith.constant 0 : i32
    %c0_i32_1 = arith.constant 0 : i32
    return %c0_i32, %c0_i32_0 : i32, i32
  }
  func.func @transform_2(%arg0: i32) -> (i32, i32) {
    %c0_i32 = arith.constant 0 : i32
    %c0_i32_0 = arith.constant 0 : i32
    return %arg0, %c0_i32 : i32, i32
  }
}

</mosaic_0001>

<llo_original>
// kernel: tpu_custom_call.1
$region0: #{tpu_custom_call.1}
  #allocation0 [shape = 'u32[]', space=smem, size = 0x4, offset = 0x4, fixed_abs, tag = 'smem constant byte address 0x4 - core index']
  #allocation1 [shape = 'u32[144,128]{1,0:T(1,128)}', space=vmem, size = 0x12000, scoped, tag = 'internal scratch']
  %s0 = inlined_call_operand.hbm [shape: f32[8,2,32], index: 0, kind: input, shape index: {}]
  %s1 = inlined_call_operand.vmem [shape: f32[1,32], index: 1, kind: input, shape index: {}]
  %s2 = inlined_call_operand.hbm [shape: f32[2,8], index: 2, kind: output, shape index: {}]
  %s3 = sld [smem:[#allocation0]]
  $region22: #{tpu_custom_call.1} parent=0
    _
  %s5 = ssub.s32 1, %s3
  %s6 = scalar_select 0, %s5, %s3
  $region1: #{tpu_custom_call.1} parent=0
    #allocation2 [shape = 'u8[8192]{0}', space=vmem, size = 0x2000, scoped, tag = 'input window, operand 0, single buffered']
    #allocation3 [shape = 's32[1]{0}', space=sflag, size = 0x4, scoped, tag = 'scoped memory for tpu_custom_call.1']
    #allocation4 [shape = 's32[1]{0}', space=sflag, size = 0x4, scoped, tag = 'scoped memory for tpu_custom_call.1']
    #allocation5 [shape = 'u8[1024]{0}', space=vmem, size = 0x400, scoped, tag = 'output window, operand 0, single buffered']
    %7 = vsyncpa [#allocation3], 0
    %8 = vsyncpa [#allocation4], 0
    // Predicated region
    $region2: #{tpu_custom_call.1} parent=1 // pred_check
      _
    $region3: #{tpu_custom_call.1} parent=1 // pred_check_branch
      %10 = sbr.rel (0) target = $region5
    $region4: #{tpu_custom_call.1} parent=1 // pred_region
      %s12 = ssub.s32 256, 256
      %13 = vsyncadd [#allocation3], %s12
      %s14 = sshll.u32 [#allocation2], 4
      %s15 = int_to_ptr.vmem [resolvable:$true] %s14
      %20 = dma.hbm_to_vmem [thread:$0]  %s0, 256, %s15, [#allocation3], 32, 32, 2
    $region5: #{tpu_custom_call.1} parent=1 // pred_fallthru
      _
    // Predicated region
    $region6: #{tpu_custom_call.1} parent=1 // pred_check
      _
    $region7: #{tpu_custom_call.1} parent=1 // pred_check_branch
      %22 = sbr.rel (0) target = $region9
    $region8: #{tpu_custom_call.1} parent=1 // pred_region
      _
    $region9: #{tpu_custom_call.1} parent=1 // pred_fallthru
      _
    // Predicated region
    $region10: #{tpu_custom_call.1} parent=1 // pred_check
      _
    $region11: #{tpu_custom_call.1} parent=1 // pred_check_branch
      %24 = sbr.rel (0) target = $region13
    $region12: #{tpu_custom_call.1} parent=1 // pred_region
      %25 = dma.done [#allocation3], 256
    $region13: #{tpu_custom_call.1} parent=1 // pred_fallthru
      _
    %v26 = vld [vmem:[#allocation2] sm:$0x3]
    %v27 = vld [vmem:[#allocation2 + $0x2] sm:$0x3]
    %v28 = vld [vmem:[#allocation2 + $0x4] sm:$0x3]
    %v29 = vld [vmem:[#allocation2 + $0x6] sm:$0x3]
    %v30 = vld [vmem:[#allocation2 + $0x8] sm:$0x3]
    %v31 = vld [vmem:[#allocation2 + $0xa] sm:$0x3]
    %v32 = vld [vmem:[#allocation2 + $0xc] sm:$0x3]
    %v33 = vld [vmem:[#allocation2 + $0xe] sm:$0x3]
    %v34 = vld [vmem:[%s1] sm:$0x1]
    %v36 = vlaneseq
    %v37 = vshrl.u32 %v36, 7
    %v38 = vsub.s32 0, %v37
    %v39 = vrot.slane %v34, %v38
    %v41 = vmul.f32 %v26, %v39
    %v42 = vmul.f32 %v27, %v39
    %v43 = vmul.f32 %v28, %v39
    %v44 = vmul.f32 %v29, %v39
    %v45 = vmul.f32 %v30, %v39
    %v46 = vmul.f32 %v31, %v39
    %v47 = vmul.f32 %v32, %v39
    %v48 = vmul.f32 %v33, %v39
    %vm49 = vcmask 254976
    %v50 = vsel %vm49, %v41, 0.0
    %51 = vadd.xlane.f32.xlu0 %v50
    %v52 = vpop.xlane.xlu0 %51
    %v53 = vsel %vm49, %v42, 0.0
    %54 = vadd.xlane.f32.xlu0 %v53
    %v55 = vpop.xlane.xlu0 %54
    %v56 = vsel %vm49, %v43, 0.0
    %57 = vadd.xlane.f32.xlu0 %v56
    %v58 = vpop.xlane.xlu0 %57
    %v59 = vsel %vm49, %v44, 0.0
    %60 = vadd.xlane.f32.xlu0 %v59
    %v61 = vpop.xlane.xlu0 %60
    %v62 = vsel %vm49, %v45, 0.0
    %63 = vadd.xlane.f32.xlu0 %v62
    %v64 = vpop.xlane.xlu0 %63
    %v65 = vsel %vm49, %v46, 0.0
    %66 = vadd.xlane.f32.xlu0 %v65
    %v67 = vpop.xlane.xlu0 %66
    %v68 = vsel %vm49, %v47, 0.0
    %69 = vadd.xlane.f32.xlu0 %v68
    %v70 = vpop.xlane.xlu0 %69
    %v71 = vsel %vm49, %v48, 0.0
    %72 = vadd.xlane.f32.xlu0 %v71
    %v73 = vpop.xlane.xlu0 %72
    %v82 = vlaneseq
    %v83 = vand.u32 %v82, 127
    %v84 = vlaneseq
    %v85 = vshrl.u32 %v84, 7
    %v86 = vsub.s32 %v83, %v85
    %v87 = vrot.slane %v52, %v86
    %v88 = vlaneseq
    %v89 = vshrl.u32 %v88, 7
    %v90 = vsub.s32 %v83, %v89
    %v91 = vrot.slane %v55, %v90
    %v92 = vlaneseq
    %v93 = vshrl.u32 %v92, 7
    %v94 = vsub.s32 %v83, %v93
    %v95 = vrot.slane %v58, %v94
    %v96 = vlaneseq
    %v97 = vshrl.u32 %v96, 7
    %v98 = vsub.s32 %v83, %v97
    %v99 = vrot.slane %v61, %v98
    %v100 = vlaneseq
    %v101 = vshrl.u32 %v100, 7
    %v102 = vsub.s32 %v83, %v101
    %v103 = vrot.slane %v64, %v102
    %v104 = vlaneseq
    %v105 = vshrl.u32 %v104, 7
    %v106 = vsub.s32 %v83, %v105
    %v107 = vrot.slane %v67, %v106
    %v108 = vlaneseq
    %v109 = vshrl.u32 %v108, 7
    %v110 = vsub.s32 %v83, %v109
    %v111 = vrot.slane %v70, %v110
    %v112 = vlaneseq
    %v113 = vshrl.u32 %v112, 7
    %v114 = vsub.s32 %v83, %v113
    %v115 = vrot.slane %v73, %v114
    %vm116 = vcmask 1041409
    %v117 = vsel %vm116, %v91, %v87
    %vm118 = vcmask 1042434
    %v119 = vsel %vm118, %v95, %v117
    %vm120 = vcmask 1043459
    %v121 = vsel %vm120, %v99, %v119
    %vm122 = vcmask 1044484
    %v123 = vsel %vm122, %v103, %v121
    %vm124 = vcmask 1045509
    %v125 = vsel %vm124, %v107, %v123
    %vm126 = vcmask 1046534
    %v127 = vsel %vm126, %v111, %v125
    %vm128 = vcmask 1047559
    %v129 = vsel %vm128, %v115, %v127
    %131 = vxpose.xlu0.b32.start [1/16] %v129, 128
    %132 = vxpose.xlu0.b32.cont [2/16] 0.0, 128
    %133 = vxpose.xlu0.b32.cont [3/16] 0.0, 128
    %134 = vxpose.xlu0.b32.cont [4/16] 0.0, 128
    %135 = vxpose.xlu0.b32.cont [5/16] 0.0, 128
    %136 = vxpose.xlu0.b32.cont [6/16] 0.0, 128
    %137 = vxpose.xlu0.b32.cont [7/16] 0.0, 128
    %138 = vxpose.xlu0.b32.cont [8/16] 0.0, 128
    %139 = vxpose.xlu0.b32.cont [9/16] 0.0, 128
    %140 = vxpose.xlu0.b32.cont [10/16] 0.0, 128
    %141 = vxpose.xlu0.b32.cont [11/16] 0.0, 128
    %142 = vxpose.xlu0.b32.cont [12/16] 0.0, 128
    %143 = vxpose.xlu0.b32.cont [13/16] 0.0, 128
    %144 = vxpose.xlu0.b32.cont [14/16] 0.0, 128
    %145 = vxpose.xlu0.b32.cont [15/16] 0.0, 128
    %146 = vxpose.xlu0.b32.end [16/16] 0.0, 128
    %v147 = vpop.trf.xlu0
    %v148 = vpop.trf.xlu0
    %v149 = vpop.trf.xlu0
    %v150 = vpop.trf.xlu0
    %v151 = vpop.trf.xlu0
    %v152 = vpop.trf.xlu0
    %v153 = vpop.trf.xlu0
    %v154 = vpop.trf.xlu0
    %v155 = vpop.trf.xlu0
    %v156 = vpop.trf.xlu0
    %v157 = vpop.trf.xlu0
    %v158 = vpop.trf.xlu0
    %v159 = vpop.trf.xlu0
    %v160 = vpop.trf.xlu0
    %v161 = vpop.trf.xlu0
    %v162 = vpop.trf.xlu0
    %vm163 = vcmask 58368
    %v164 = vsel %vm163, %v147, -inf
    %165 = vmax.xlane.f32.xlu0 %v164
    %v166 = vpop.xlane.xlu0 %165
    %v167 = vsub.f32 %v147, %v166
    %v168 = vmul.f32 %v167, 1.442695
    %v169 = vpow.pop %v168
    %v170 = vsel %vm163, %v169, 0.0
    %171 = vadd.xlane.f32.xlu0 %v170
    %v172 = vpop.xlane.xlu0 %171
    %v173 = vrcp.pop %v172
    %v174 = vmul.f32 %v169, %v173
    %175 = vst.msk [vmem:[#allocation5] sm:$0x3] %vm163, %v174
    // Predicated region
    $region14: #{tpu_custom_call.1} parent=1 // pred_check
      _
    $region15: #{tpu_custom_call.1} parent=1 // pred_check_branch
      %177 = sbr.rel (0) target = $region17
    $region16: #{tpu_custom_call.1} parent=1 // pred_region
      %s179 = ssub.s32 32, 32
      %180 = vsyncadd [#allocation4], %s179
      %s182 = sshll.u32 [#allocation5], 4
      %s183 = int_to_ptr.vmem [resolvable:$true] %s182
      %185 = dma.vmem_to_hbm [thread:$0]  %s183, 32, %s2, [#allocation4]
    $region17: #{tpu_custom_call.1} parent=1 // pred_fallthru
      _
    // Predicated region
    $region18: #{tpu_custom_call.1} parent=1 // pred_check
      _
    $region19: #{tpu_custom_call.1} parent=1 // pred_check_branch
      %187 = sbr.rel (0) target = $region21
    $region20: #{tpu_custom_call.1} parent=1 // pred_region
      %188 = dma.done [#allocation4], 32
    $region21: #{tpu_custom_call.1} parent=1 // pred_fallthru
      _
    %189 = vsyncpa [#allocation3], 1
    %190 = vsyncpa [#allocation4], 1

</llo_original>
